<compile_context>
chip_gen: v6e
topology: v6e:2x2x1
jax: 0.10.0
libtpu: 0.0.40
codegen_flags: <defaults>
</compile_context>

<pallas_src>
import math

import jax
import jax.numpy as jnp
from jax.experimental import pallas as pl
from jax.experimental.pallas import tpu as pltpu


def _pos_emb_kernel(x_ref, wp_ref, o_ref):
    """x_ref: (BT, 1); wp_ref: (2, out_dim) = [2pi*w row; phase row]; o_ref: (BT, out_dim)."""
    x = x_ref[...]                       # (BT, 1)
    w = wp_ref[0:1, :]                   # (1, out_dim): [0, 2pi*w, 2pi*w]
    phase = wp_ref[1:2, :]               # (1, out_dim): [0, 0..0, pi/2..pi/2]

    theta = x * w + phase                # (BT, out_dim)  broadcast mul+add (VPU)
    trig = jnp.sin(theta)                # single EUP pass; cos handled by +pi/2 phase

    col = jax.lax.broadcasted_iota(jnp.int32, theta.shape, 1)
    o_ref[...] = jnp.where(col == 0, x, trig)   # col 0 -> raw x passthrough


def _choose_tiling(B, max_block=512):
    """Return (block_b, b_pad): one big step when small, >=2 parallel steps when large."""
    b8 = pl.cdiv(B, 8) * 8               # sublane-multiple batch
    if b8 <= max_block:
        return b8, b8                    # single grid step covers the whole batch
    block = max_block                    # 512 rows/step -> >=2 steps (v7x megacore)
    b_pad = pl.cdiv(b8, block) * block
    return block, b_pad


def random_or_learned_sinusoidal_pos_emb(x, weights):
    """x: (B,) float32 timesteps, weights: (half_dim,) float32. Returns (B, 2*half_dim+1)."""
    B = x.shape[0]
    half_dim = weights.shape[0]
    out_dim = 2 * half_dim + 1

    block_b, b_pad = _choose_tiling(B)
    x2d = jnp.pad(x.astype(jnp.float32), (0, b_pad - B)).reshape(b_pad, 1)

    # Row 0: per-column frequency scale (2*pi folded in); col 0 is the x slot (scale 0).
    # Row 1: per-column phase; pi/2 on the cos half so cos(t) = sin(t + pi/2).
    w32 = weights.astype(jnp.float32)
    zero1 = jnp.zeros((1,), jnp.float32)
    w_row = jnp.concatenate([zero1, w32, w32]) * (2.0 * math.pi)
    phase_row = jnp.concatenate(
        [zero1,
         jnp.zeros((half_dim,), jnp.float32),
         jnp.full((half_dim,), math.pi / 2.0, jnp.float32)])
    wp = jnp.stack([w_row, phase_row], axis=0)            # (2, out_dim)

    out = pl.pallas_call(
        _pos_emb_kernel,
        out_shape=jax.ShapeDtypeStruct((b_pad, out_dim), jnp.float32),
        grid=(b_pad // block_b,),
        in_specs=[
            pl.BlockSpec((block_b, 1), lambda i: (i, 0)),     # x batch tile
            pl.BlockSpec((2, out_dim), lambda i: (0, 0)),     # freq/phase table, VMEM-resident
        ],
        out_specs=pl.BlockSpec((block_b, out_dim), lambda i: (i, 0)),
        compiler_params=pltpu.CompilerParams(
            dimension_semantics=("parallel",)),
    )(x2d, wp)

    return out[:B]


def reference(x, weights):
    """Pure-JAX mirror of the PyTorch forward."""
    x_ = x[:, None].astype(jnp.float32)
    freqs = x_ * weights[None, :].astype(jnp.float32) * 2.0 * math.pi
    fouriered = jnp.concatenate([jnp.sin(freqs), jnp.cos(freqs)], axis=-1)
    return jnp.concatenate([x_, fouriered], axis=-1)


if __name__ == "__main__":
    key = jax.random.PRNGKey(0)
    k_x, k_w, k_x2 = jax.random.split(key, 3)

    # Small, module-consistent shapes: x is (B,) scalar timesteps,
    # weights is nn.Parameter(torch.randn(half_dim)); `is_random` only
    # toggles requires_grad, forward is identical either way.
    B = 2
    DIM = 16                      # module's `dim` (must be even)
    HALF_DIM = DIM // 2

    x = jax.random.normal(k_x, (B,), dtype=jnp.float32)
    weights = jax.random.normal(k_w, (HALF_DIM,), dtype=jnp.float32)

    y = random_or_learned_sinusoidal_pos_emb(x, weights)
    y = jax.block_until_ready(y)
    y_ref = reference(x, weights)
    assert y.shape == (B, DIM + 1)
    assert jnp.allclose(y, y_ref, atol=1e-4, rtol=1e-4), "mismatch vs reference (small B)"

    # Secondary smoke check: multi-step grid path (B > 512 -> 512-row tiles, 2 steps).
    B2 = 600
    x2 = jax.random.normal(k_x2, (B2,), dtype=jnp.float32)
    y2 = jax.block_until_ready(random_or_learned_sinusoidal_pos_emb(x2, weights))
    y2_ref = reference(x2, weights)
    assert y2.shape == (B2, DIM + 1)
    assert jnp.allclose(y2, y2_ref, atol=1e-4, rtol=1e-4), "mismatch vs reference (large B)"

    print("KERNEL_OK")
</pallas_src>

<mosaic_0001>
module attributes {stable_mosaic.version = 11 : i64} {
  func.func @_pos_emb_kernel(%arg0: i32, %arg1: memref<8x1xf32, #tpu.memory_space<vmem>>, %arg2: memref<2x17xf32, #tpu.memory_space<vmem>>, %arg3: memref<8x17xf32, #tpu.memory_space<vmem>>) attributes {dimension_semantics = [#tpu.dimension_semantics<parallel>], iteration_bounds = array<i64: 1>, scalar_prefetch = 0 : i64, scratch_operands = 0 : i64, tpu.core_type = #tpu.core_type<tc>, window_params = [{transform_indices = @transform_0, window_bounds = array<i64: 8, 1>}, {pipeline_mode = #tpu.pipeline_mode<synchronous>, transform_indices = @transform_1, window_bounds = array<i64: 2, 17>}, {transform_indices = @transform_2, window_bounds = array<i64: 8, 17>}]} {
    %c0 = arith.constant 0 : index
    %c0_0 = arith.constant 0 : index
    %0 = vector.load %arg1[%c0, %c0_0] : memref<8x1xf32, #tpu.memory_space<vmem>>, vector<8x1xf32>
    %c0_1 = arith.constant 0 : index
    %c0_2 = arith.constant 0 : index
    %1 = vector.load %arg2[%c0_1, %c0_2] : memref<2x17xf32, #tpu.memory_space<vmem>>, vector<1x17xf32>
    %c1 = arith.constant 1 : index
    %c0_3 = arith.constant 0 : index
    %2 = vector.load %arg2[%c1, %c0_3] : memref<2x17xf32, #tpu.memory_space<vmem>>, vector<1x17xf32>
    %3 = vector.broadcast %0 : vector<8x1xf32> to vector<8x17xf32>
    %4 = vector.broadcast %1 : vector<1x17xf32> to vector<8x17xf32>
    %5 = arith.mulf %3, %4 : vector<8x17xf32>
    %6 = vector.broadcast %2 : vector<1x17xf32> to vector<8x17xf32>
    %7 = arith.addf %5, %6 : vector<8x17xf32>
    %8 = math.sin %7 : vector<8x17xf32>
    %9 = tpu.iota {dimensions = array<i32: 1>} : vector<8x17xi32>
    %c0_i32 = arith.constant 0 : i32
    %10 = vector.broadcast %c0_i32 : i32 to vector<8x17xi32>
    %11 = arith.cmpi eq, %9, %10 : vector<8x17xi32>
    %12 = vector.shape_cast %0 : vector<8x1xf32> to vector<8x1xf32>
    %13 = vector.broadcast %12 : vector<8x1xf32> to vector<8x17xf32>
    %14 = arith.select %11, %13, %8 : vector<8x17xi1>, vector<8x17xf32>
    %c0_4 = arith.constant 0 : index
    %c0_5 = arith.constant 0 : index
    %15 = vector.load %arg3[%c0_4, %c0_5] : memref<8x17xf32, #tpu.memory_space<vmem>>, vector<8x17xf32>
    tpu.vector_store %arg3[%c0_4, %c0_5], %14 {strides = array<i32>} : memref<8x17xf32, #tpu.memory_space<vmem>>, vector<8x17xf32>,
    return
  }
  func.func @transform_0(%arg0: i32) -> (i32, i32) {
    %c0_i32 = arith.constant 0 : i32
    %c0_i32_0 = arith.constant 0 : i32
    return %arg0, %c0_i32 : i32, i32
  }
  func.func @transform_1(%arg0: i32) -> (i32, i32) {
    %c0_i32 = arith.constant 0 : i32
    %c0_i32_0 = arith.constant 0 : i32
    %c0_i32_1 = arith.constant 0 : i32
    return %c0_i32, %c0_i32_0 : i32, i32
  }
  func.func @transform_2(%arg0: i32) -> (i32, i32) {
    %c0_i32 = arith.constant 0 : i32
    %c0_i32_0 = arith.constant 0 : i32
    return %arg0, %c0_i32 : i32, i32
  }
}

</mosaic_0001>

<llo_original>
// kernel: tpu_custom_call.1
$region0: #{tpu_custom_call.1}
  #allocation0 [shape = 'u32[]', space=smem, size = 0x4, offset = 0x4, fixed_abs, tag = 'smem constant byte address 0x4 - core index']
  #allocation1 [shape = 'u32[144,128]{1,0:T(1,128)}', space=vmem, size = 0x12000, scoped, tag = 'internal scratch']
  %s0 = inlined_call_operand.vmem [shape: f32[8,1], index: 0, kind: input, shape index: {}]
  %s1 = inlined_call_operand.vmem [shape: f32[2,17], index: 1, kind: input, shape index: {}]
  %s2 = inlined_call_operand.hbm [shape: f32[8,17], index: 2, kind: output, shape index: {}]
  %s3 = sld [smem:[#allocation0]]
  $region18: #{tpu_custom_call.1} parent=0
    _
  %s5 = ssub.s32 1, %s3
  %s6 = scalar_select 0, %s5, %s3
  $region1: #{tpu_custom_call.1} parent=0
    #allocation2 [shape = 'u8[4096]{0}', space=vmem, size = 0x1000, scoped, tag = 'output window, operand 0, single buffered']
    #allocation3 [shape = 's32[1]{0}', space=sflag, size = 0x4, scoped, tag = 'scoped memory for tpu_custom_call.1']
    %7 = vsyncpa [#allocation3], 0
    // Predicated region
    $region2: #{tpu_custom_call.1} parent=1 // pred_check
      _
    $region3: #{tpu_custom_call.1} parent=1 // pred_check_branch
      %9 = sbr.rel (0) target = $region5
    $region4: #{tpu_custom_call.1} parent=1 // pred_region
      _
    $region5: #{tpu_custom_call.1} parent=1 // pred_fallthru
      _
    // Predicated region
    $region6: #{tpu_custom_call.1} parent=1 // pred_check
      _
    $region7: #{tpu_custom_call.1} parent=1 // pred_check_branch
      %11 = sbr.rel (0) target = $region9
    $region8: #{tpu_custom_call.1} parent=1 // pred_region
      _
    $region9: #{tpu_custom_call.1} parent=1 // pred_fallthru
      _
    %v12 = vld [vmem:[%s0] sm:$0xff]
    %v13 = vld [vmem:[%s1] sm:$0x1]
    %v14 = vld [vmem:[%s1 + $0x1] sm:$0x1]
    %16 = vset.pattern.permute.xlu0 0
    %17 = vperm.xlu0 %16, %v12
    %v18 = vpop.permute.xlu0 %17
    %v20 = vlaneseq
    %v21 = vshrl.u32 %v20, 7
    %v22 = vsub.s32 0, %v21
    %v23 = vrot.slane %v13, %v22
    %v24 = vmul.f32 %v18, %v23
    %v25 = vlaneseq
    %v26 = vshrl.u32 %v25, 7
    %v27 = vsub.s32 0, %v26
    %v28 = vrot.slane %v14, %v27
    %v29 = vadd.f32 %v24, %v28
    %v30 = vand.u32 2147483647, %v29
    %vm31 = vcmp.le.f32.partialorder %v30, 0.7853982
    %vm32 = vcmp.lt.s32.totalorder %v29, 0
    %v33 = vand.u32 %v29, 2139095040
    %v34 = vshrl.u32 %v33, 23
    %v35 = vsub.s32 %v34, 127
    %v36 = vand.u32 2147483647, %v29
    %v37 = vand.u32 %v36, 8388607
    %v38 = vor.u32 %v37, 8388608
    %v39 = vsub.s32 0, %v38
    %v40 = vadd.s32 %v35, 1
    %vm41 = vcmp.gt.s32.totalorder %v40, 0
    %v42 = vsel %vm41, %v40, 0
    %v43 = vshrl.u32 %v42, 5
    %v44 = vand.u32 %v42, 31
    %v45 = vsub.s32 32, %v44
    %v46 = vshrl.u32 683565275, %v45
    %v47 = vshll.u32 683565275, %v44
    %v48 = vshrl.u32 2475754826, %v45
    %v49 = vor.u32 %v47, %v48
    %v50 = vshll.u32 2475754826, %v44
    %v51 = vshrl.u32 2131351028, %v45
    %v52 = vor.u32 %v50, %v51
    %v53 = vshll.u32 2131351028, %v44
    %v54 = vshrl.u32 2102212464, %v45
    %v55 = vor.u32 %v53, %v54
    %v56 = vshll.u32 2102212464, %v44
    %v57 = vshrl.u32 920167782, %v45
    %v58 = vor.u32 %v56, %v57
    %v59 = vshll.u32 920167782, %v44
    %v60 = vshrl.u32 1326507024, %v45
    %v61 = vor.u32 %v59, %v60
    %vm62 = vcmp.lt.s32.totalorder %v43, 1
    %vm63 = vcmp.lt.s32.totalorder %v43, 2
    %vm64 = vcmp.lt.s32.totalorder %v43, 3
    %vm65 = vcmp.lt.s32.totalorder %v43, 4
    %v66 = vsel %vm62, %v46, %v49
    %v67 = vsel %vm65, %v55, 2102212464
    %v68 = vsel %vm64, %v52, %v67
    %v69 = vsel %vm63, %v66, %v68
    %v70 = vsel %vm62, %v49, %v52
    %v71 = vsel %vm65, %v58, 920167782
    %v72 = vsel %vm64, %v55, %v71
    %v73 = vsel %vm63, %v70, %v72
    %v74 = vsel %vm62, %v52, %v55
    %v75 = vsel %vm65, %v61, 1326507024
    %v76 = vsel %vm64, %v58, %v75
    %v77 = vsel %vm63, %v74, %v76
    %v78 = vshll.u32 %v38, 8
    %v79 = vmul.u32.u64.compose %v78, %v77
    %v80 = vextract.low.u32 %v79
    %v81 = vextract.high.u32 %v79
    %v82 = vmul.u32.u64.compose %v78, %v73
    %v83 = vextract.low.u32 %v82
    %v84 = vextract.high.u32 %v82
    %v85 = vmul.u32 %v78, %v69
    %v86 = vadd.s32 %v81, %v83
    %vm87 = vc.u32 %v81, %v83
    %v88 = vadd.s32 %v84, 1
    %v89 = vsel %vm87, %v88, %v84
    %v90 = vadd.s32 %v85, %v89
    %v91 = vadd.s32 %v90, 536870912
    %v92 = vshrl.u32 %v91, 30
    %v93 = vshll.u32 %v92, 30
    %v94 = vsub.s32 %v90, %v93
    %vm95 = vcmp.lt.s32.totalorder %v94, 0
    %v96 = vsub.s32 0, %v94
    %v97 = vsel %vm95, %v96, %v94
    %v98 = vclz %v97
    %v99 = vsub.s32 %v98, 2
    %vm100 = vcmp.gt.s32.totalorder 0, %v99
    %v101 = vsel %vm100, 0, %v99
    %v102 = vsub.s32 32, %v101
    %v103 = vshll.u32 %v94, %v101
    %v104 = vshrl.u32 %v86, %v102
    %v105 = vor.u32 %v103, %v104
    %v106 = vsub.s32 4294967266, %v101
    %v107 = vadd.s32 %v106, 127
    %v108 = vshll.u32 %v107, 23
    %v109 = vor.u32 4788187, %v108
    %v110 = vand.u32 2147483647, %v109
    %v112 = vcvt.s32.f32 %v105
    %v113 = vmul.f32 %v112, %v110
    %v114 = vxor.u32 %v113, 2147483648
    %v115 = vsel %vm32, %v114, %v113
    %v116 = vsub.s32 4, %v92
    %v117 = vsel %vm32, %v116, %v92
    %v118 = vsel %vm31, %v29, %v115
    %v119 = vsel %vm31, 0, %v117
    %v120 = vcosq.f32.pop %v118
    %v121 = vsinq.f32.pop %v118
    %vm122 = vweird.f32 %v29
    %v123 = vadd.s32 %v119, 3
    %v124 = vand.u32 %v123, 3
    %vm125 = vcmp.lt.s32.totalorder %v124, 2
    %vm126 = vcmp.eq.s32.totalorder %v124, 0
    %v127 = vxor.u32 %v121, 2147483648
    %v128 = vsel %vm126, %v120, %v127
    %vm129 = vcmp.eq.s32.totalorder %v124, 2
    %v130 = vxor.u32 %v120, 2147483648
    %v131 = vsel %vm129, %v130, %v121
    %v132 = vsel %vm125, %v128, %v131
    %v133 = vsel %vm122, nan, %v132
    %v134 = vlaneseq
    %v135 = vand.u32 %v134, 127
    %vm136 = vcmp.eq.s32.totalorder %v135, 0
    %v137 = vsel %vm136, %v18, %v133
    %vm138 = vcmask 138240
    %139 = vst.msk [vmem:[#allocation2] sm:$0xff] %vm138, %v137
    // Predicated region
    $region10: #{tpu_custom_call.1} parent=1 // pred_check
      _
    $region11: #{tpu_custom_call.1} parent=1 // pred_check_branch
      %141 = sbr.rel (0) target = $region13
    $region12: #{tpu_custom_call.1} parent=1 // pred_region
      %s143 = ssub.s32 128, 128
      %144 = vsyncadd [#allocation3], %s143
      %s146 = sshll.u32 [#allocation2], 4
      %s147 = int_to_ptr.vmem [resolvable:$true] %s146
      %149 = dma.vmem_to_hbm [thread:$0]  %s147, 128, %s2, [#allocation3]
    $region13: #{tpu_custom_call.1} parent=1 // pred_fallthru
      _
    // Predicated region
    $region14: #{tpu_custom_call.1} parent=1 // pred_check
      _
    $region15: #{tpu_custom_call.1} parent=1 // pred_check_branch
      %151 = sbr.rel (0) target = $region17
    $region16: #{tpu_custom_call.1} parent=1 // pred_region
      %152 = dma.done [#allocation3], 128
    $region17: #{tpu_custom_call.1} parent=1 // pred_fallthru
      _
    %153 = vsyncpa [#allocation3], 1

</llo_original>
